<compile_context>
chip_gen: v7x
topology: tpu7x:2x2x1
jax: 0.10.0
libtpu: 0.0.40
codegen_flags: <defaults>
</compile_context>

<pallas_src>
import functools

import numpy as np
import jax
import jax.numpy as jnp
from jax import lax
from jax.experimental import pallas as pl
from jax.experimental.pallas import tpu as pltpu

EPSILON = float(np.finfo(np.float32).eps)


def _round_up(x, m):
    return ((x + m - 1) // m) * m


def _num_tensorcores():
    """Best-effort TensorCore count of the local device (v7x has 2, else 1)."""
    try:
        dev = jax.devices()[0]
        n = getattr(dev, "num_cores", None)
        if isinstance(n, int) and n > 0:
            return n
        kind = str(getattr(dev, "device_kind", "")).lower()
        return 2 if "v7" in kind else 1
    except Exception:  # pragma: no cover - conservative fallback
        return 1


def _pick_tile_b(batch, act_row_bytes, resident_bytes, requested, budget_bytes,
                 num_cores):
    """Largest batch tile that (a) covers the batch, (b) keeps the working set
    (act_row_bytes already includes double-buffering) under a VMEM budget, and
    (c) on multi-TC parts (v7x) yields an even number (>= 2) of grid steps so
    the "parallel" batch axis can be sharded across both TensorCores."""
    tb = min(_round_up(max(requested, 8), 8), _round_up(max(batch, 8), 8))
    while tb > 8 and tb * act_row_bytes + resident_bytes > budget_bytes:
        tb = _round_up(tb // 2, 8)
    # NOTE: at tb == 8 the residents alone may still exceed the budget; the
    # caller compensates by raising vmem_limit_bytes explicitly (see below).
    if num_cores > 1 and batch > 8:
        steps = -(-batch // tb)
        steps = max(2, steps + (steps % 2))           # even, >= 2
        tb = min(tb, _round_up(-(-batch // steps), 8))
    return tb


def _vmem_limit_bytes(need_bytes):
    """Only override the scoped-VMEM default when the working set needs it.
    Cap below every generation's physical VMEM (v7x: 64 MiB per TensorCore)."""
    if need_bytes <= 12 * 1024 * 1024:
        return None
    return int(min(max(need_bytes * 3 // 2, 16 * 1024 * 1024), 48 * 1024 * 1024))


def _recip(denom, approx):
    if approx:
        r = pl.reciprocal(denom, approx=True)         # EUP vrcp (free-ish slot)
        return r * (2.0 - denom * r)                  # one Newton step -> ~f32
    return pl.reciprocal(denom, approx=False)


# ---------------------------------------------------------------------------
# Single UnsuperLayer
# ---------------------------------------------------------------------------
def _unsuper_layer_kernel(y_ref, x_ref, wf_ref, c_ref, o_ref, *,
                          comp, approx_reciprocal):
    """One batch tile.

    y_ref:  (TB, C)       current factor tile
    x_ref:  (TB, F)       data tile
    wf_ref: (C+F, 2C)     block-diag [[W1^T + l2*I, 0], [0, W2^T]] (resident)
    c_ref:  (1,)          l_1 + EPS (SMEM scalar)
    o_ref:  (TB, C)       output tile
    """
    y = y_ref[...]
    # Single fused MXU pass: [denom_partial | numer] = [y | x] @ W_blockdiag.
    yx = jnp.concatenate([y, x_ref[...]], axis=-1)
    dn = jnp.dot(yx, wf_ref[...],
                 preferred_element_type=jnp.float32,
                 precision=lax.Precision.HIGHEST)
    denom = dn[:, :comp] + c_ref[0]
    numer = dn[:, comp:]
    o_ref[...] = (numer * _recip(denom, approx_reciprocal) * y).astype(o_ref.dtype)


def unsuper_layer(y, x, w1, w2, l_1, l_2, *, tile_b=1024,
                  approx_reciprocal=False,
                  vmem_budget_bytes=12 * 1024 * 1024):
    """y: (B, comp), x: (B, features); w1: (comp, comp), w2: (comp, features)."""
    B, C = y.shape
    Bx, F = x.shape
    assert Bx == B, "y and x must share the batch dimension"
    dtype = y.dtype

    # Per batch-row VMEM (f32): double-buffered y/x/out tiles + in-kernel
    # [y|x] concat and the (tb, 2C) fused-matmul result intermediates.
    act_row_bytes = 4 * (2 * (C + F + C) + (C + F) + 2 * C)
    resident_bytes = 2 * 4 * (C + F) * 2 * C          # fused weight (x2 buffers)
    tb = _pick_tile_b(B, act_row_bytes, resident_bytes, tile_b,
                      vmem_budget_bytes, _num_tensorcores())
    Bp = _round_up(B, tb)
    if Bp != B:
        # Zero-padded rows: numerator = 0, denominator = l_1 + EPS > 0 -> output 0.
        y = jnp.pad(y, ((0, Bp - B), (0, 0)))
        x = jnp.pad(x, ((0, Bp - B), (0, 0)))

    # Fold l_2 into fc1's transposed weight and build the block-diagonal weight.
    w1t_eff = w1.T.astype(jnp.float32) + l_2 * jnp.eye(C, dtype=jnp.float32)
    w2t = w2.T.astype(jnp.float32)
    wf = jnp.zeros((C + F, 2 * C), jnp.float32)
    wf = wf.at[:C, :C].set(w1t_eff)
    wf = wf.at[C:, C:].set(w2t)
    c = jnp.reshape(jnp.asarray(l_1, jnp.float32) + EPSILON, (1,))

    grid = (Bp // tb,)
    flops = 2 * Bp * (C + F) * (2 * C) + 5 * Bp * C
    bytes_accessed = 4 * (Bp * (2 * C + F) + (C + F) * 2 * C)
    transcendentals = Bp * C if approx_reciprocal else 0

    out = pl.pallas_call(
        functools.partial(_unsuper_layer_kernel, comp=C,
                          approx_reciprocal=approx_reciprocal),
        out_shape=jax.ShapeDtypeStruct((Bp, C), dtype),
        grid_spec=pltpu.PrefetchScalarGridSpec(
            num_scalar_prefetch=0,
            grid=grid,
            in_specs=[
                pl.BlockSpec((tb, C), lambda i: (i, 0)),        # y tile
                pl.BlockSpec((tb, F), lambda i: (i, 0)),        # x tile
                pl.BlockSpec((C + F, 2 * C), lambda i: (0, 0)),  # block-diag W (resident)
                pl.BlockSpec(memory_space=pltpu.SMEM),          # l1 + EPS scalar
            ],
            out_specs=pl.BlockSpec((tb, C), lambda i: (i, 0)),
        ),
        compiler_params=pltpu.CompilerParams(
            dimension_semantics=("parallel",),
            vmem_limit_bytes=_vmem_limit_bytes(tb * act_row_bytes + resident_bytes),
        ),
        cost_estimate=pl.CostEstimate(
            flops=flops,
            transcendentals=transcendentals,
            bytes_accessed=bytes_accessed,
        ),
    )(y, x, wf, c)

    return out[:B] if Bp != B else out


# ---------------------------------------------------------------------------
# Fused stack of UnsuperLayers (DeepNMF): keeps y resident across layers.
# ---------------------------------------------------------------------------
def _unsuper_stack_kernel(y_ref, x_ref, w1t_ref, w2t_all_ref, c_ref, o_ref, *,
                          num_layers, comp, approx_reciprocal):
    """w1t_ref: (L, C, C) = W1_l^T + l2_l*I;  w2t_all_ref: (F, L*C);  c_ref: (L,)."""
    y = y_ref[...].astype(jnp.float32)
    # Hoisted numerators: all layers share x -> one wide N = L*C matmul.
    numer_all = jnp.dot(x_ref[...], w2t_all_ref[...],
                        preferred_element_type=jnp.float32,
                        precision=lax.Precision.HIGHEST)        # (TB, L*C)
    for layer in range(num_layers):                             # static unroll
        denom = jnp.dot(y, w1t_ref[layer],
                        preferred_element_type=jnp.float32,
                        precision=lax.Precision.HIGHEST) + c_ref[layer]
        numer = numer_all[:, layer * comp:(layer + 1) * comp]   # static lane slice
        y = numer * _recip(denom, approx_reciprocal) * y
    o_ref[...] = y.astype(o_ref.dtype)


def unsuper_deep(y, x, w1_stack, w2_stack, l1s, l2s, *, tile_b=1024,
                 approx_reciprocal=False,
                 vmem_budget_bytes=12 * 1024 * 1024):
    """Fused forward of L stacked UnsuperLayers sharing the same x.

    y: (B, comp), x: (B, features),
    w1_stack: (L, comp, comp), w2_stack: (L, comp, features), l1s/l2s: (L,).
    """
    B, C = y.shape
    Bx, F = x.shape
    assert Bx == B
    L = int(w1_stack.shape[0])
    dtype = y.dtype

    act_row_bytes = 4 * (2 * (C + F + C) + L * C + 2 * C)
    resident_bytes = 2 * 4 * (L * C * C + F * L * C)
    tb = _pick_tile_b(B, act_row_bytes, resident_bytes, tile_b,
                      vmem_budget_bytes, _num_tensorcores())
    Bp = _round_up(B, tb)
    if Bp != B:
        y = jnp.pad(y, ((0, Bp - B), (0, 0)))
        x = jnp.pad(x, ((0, Bp - B), (0, 0)))

    l2s = jnp.asarray(l2s, jnp.float32)
    eye = jnp.eye(C, dtype=jnp.float32)
    w1t_eff = (jnp.transpose(w1_stack, (0, 2, 1)).astype(jnp.float32)
               + l2s[:, None, None] * eye)                        # (L, C, C)
    # (F, L*C): column block l holds W2_l^T -> one wide numerator matmul.
    w2t_all = jnp.transpose(w2_stack, (2, 0, 1)).astype(jnp.float32).reshape(F, L * C)
    c = jnp.asarray(l1s, jnp.float32) + EPSILON                   # (L,)

    grid = (Bp // tb,)
    flops = 2 * Bp * F * L * C + L * (2 * Bp * C * C + 5 * Bp * C)
    bytes_accessed = 4 * (Bp * (2 * C + F) + L * (C * C + F * C))
    transcendentals = L * Bp * C if approx_reciprocal else 0

    out = pl.pallas_call(
        functools.partial(_unsuper_stack_kernel, num_layers=L, comp=C,
                          approx_reciprocal=approx_reciprocal),
        out_shape=jax.ShapeDtypeStruct((Bp, C), dtype),
        grid_spec=pltpu.PrefetchScalarGridSpec(
            num_scalar_prefetch=0,
            grid=grid,
            in_specs=[
                pl.BlockSpec((tb, C), lambda i: (i, 0)),          # y tile
                pl.BlockSpec((tb, F), lambda i: (i, 0)),          # x tile
                pl.BlockSpec((L, C, C), lambda i: (0, 0, 0)),     # W1^T+l2*I stack (resident)
                pl.BlockSpec((F, L * C), lambda i: (0, 0)),       # wide W2^T (resident)
                pl.BlockSpec(memory_space=pltpu.SMEM),            # per-layer l1 + EPS
            ],
            out_specs=pl.BlockSpec((tb, C), lambda i: (i, 0)),
        ),
        compiler_params=pltpu.CompilerParams(
            dimension_semantics=("parallel",),
            vmem_limit_bytes=_vmem_limit_bytes(tb * act_row_bytes + resident_bytes),
        ),
        cost_estimate=pl.CostEstimate(
            flops=flops,
            transcendentals=transcendentals,
            bytes_accessed=bytes_accessed,
        ),
    )(y, x, w1t_eff, w2t_all, c)

    return out[:B] if Bp != B else out


# ---------------------------------------------------------------------------
# Pure-JAX reference (matches the PyTorch forward exactly)
# ---------------------------------------------------------------------------
def unsuper_layer_ref(y, x, w1, w2, l_1, l_2):
    denominator = y @ w1.T + (l_2 * y + l_1 + EPSILON)
    numerator = x @ w2.T
    return (numerator / denominator) * y


if __name__ == "__main__":
    # Small shapes consistent with the module: comp=32, features=64, batch=16.
    B, COMP, FEAT = 16, 32, 64
    L1, L2 = 0.1, 0.2

    key = jax.random.PRNGKey(0)
    k_y, k_x, k_w1, k_w2 = jax.random.split(key, 4)

    # NMF keeps factors, data and (typically) weights nonnegative; positive inputs
    # keep the multiplicative-update division well-conditioned for the 1e-5 check.
    y = jax.random.uniform(k_y, (B, COMP), dtype=jnp.float32, minval=0.1, maxval=1.0)
    x = jax.random.uniform(k_x, (B, FEAT), dtype=jnp.float32, minval=0.1, maxval=1.0)
    bound1 = 1.0 / np.sqrt(COMP)
    bound2 = 1.0 / np.sqrt(FEAT)
    w1 = jax.random.uniform(k_w1, (COMP, COMP), dtype=jnp.float32, minval=0.0, maxval=bound1)
    w2 = jax.random.uniform(k_w2, (COMP, FEAT), dtype=jnp.float32, minval=0.0, maxval=bound2)

    expected = unsuper_layer_ref(y, x, w1, w2, L1, L2)

    # --- single layer (exact reciprocal) ---
    out = jax.block_until_ready(unsuper_layer(y, x, w1, w2, L1, L2))
    np.testing.assert_allclose(np.asarray(out), np.asarray(expected),
                               rtol=1e-5, atol=1e-5)

    # --- single layer (EUP approx reciprocal + one Newton step) ---
    out_approx = jax.block_until_ready(
        unsuper_layer(y, x, w1, w2, L1, L2, approx_reciprocal=True))
    np.testing.assert_allclose(np.asarray(out_approx), np.asarray(expected),
                               rtol=1e-3, atol=1e-3)

    # --- fused 3-layer DeepNMF stack (y kept resident in VMEM across layers) ---
    NL = 3
    kw = jax.random.split(jax.random.PRNGKey(1), 2 * NL)
    w1s = jnp.stack([jax.random.uniform(kw[i], (COMP, COMP), dtype=jnp.float32,
                                        minval=0.0, maxval=bound1) for i in range(NL)])
    w2s = jnp.stack([jax.random.uniform(kw[NL + i], (COMP, FEAT), dtype=jnp.float32,
                                        minval=0.0, maxval=bound2) for i in range(NL)])
    l1s = jnp.asarray([0.1, 0.05, 0.02], jnp.float32)
    l2s = jnp.asarray([0.2, 0.10, 0.05], jnp.float32)

    out_deep = jax.block_until_ready(unsuper_deep(y, x, w1s, w2s, l1s, l2s))
    exp_deep = y
    for i in range(NL):
        exp_deep = unsuper_layer_ref(exp_deep, x, w1s[i], w2s[i],
                                     float(l1s[i]), float(l2s[i]))
    np.testing.assert_allclose(np.asarray(out_deep), np.asarray(exp_deep),
                               rtol=1e-5, atol=1e-5)

    print("KERNEL_OK")
</pallas_src>

<mosaic_0001>
module attributes {stable_mosaic.version = 11 : i64} {
  func.func @_unsuper_layer_kernel(%arg0: i32, %arg1: memref<16x32xf32, #tpu.memory_space<vmem>>, %arg2: memref<16x64xf32, #tpu.memory_space<vmem>>, %arg3: memref<96x64xf32, #tpu.memory_space<vmem>>, %arg4: memref<1xf32, #tpu.memory_space<smem>>, %arg5: memref<16x32xf32, #tpu.memory_space<vmem>>) attributes {dimension_semantics = [#tpu.dimension_semantics<parallel>], iteration_bounds = array<i64: 1>, scalar_prefetch = 0 : i64, scratch_operands = 0 : i64, tpu.core_type = #tpu.core_type<tc>, window_params = [{transform_indices = @transform_0, window_bounds = array<i64: 16, 32>}, {transform_indices = @transform_1, window_bounds = array<i64: 16, 64>}, {pipeline_mode = #tpu.pipeline_mode<synchronous>, transform_indices = @transform_2, window_bounds = array<i64: 96, 64>}, {transform_indices = @transform_3, window_bounds = array<i64: 1>}, {transform_indices = @transform_4, window_bounds = array<i64: 16, 32>}]} {
    %c0 = arith.constant 0 : index
    %c0_0 = arith.constant 0 : index
    %0 = vector.load %arg1[%c0, %c0_0] : memref<16x32xf32, #tpu.memory_space<vmem>>, vector<16x32xf32>
    %c0_1 = arith.constant 0 : index
    %c0_2 = arith.constant 0 : index
    %1 = vector.load %arg2[%c0_1, %c0_2] : memref<16x64xf32, #tpu.memory_space<vmem>>, vector<16x64xf32>
    %2 = tpu.concatenate %0, %1 in 1 : vector<16x32xf32>, vector<16x64xf32> -> vector<16x96xf32>
    %c0_3 = arith.constant 0 : index
    %c0_4 = arith.constant 0 : index
    %3 = vector.load %arg3[%c0_3, %c0_4] : memref<96x64xf32, #tpu.memory_space<vmem>>, vector<96x64xf32>
    %cst = arith.constant dense<0.000000e+00> : vector<16x64xf32>
    %4 = tpu.matmul %2, %3, %cst {dimension_numbers = #tpu.dot_dimension_numbers<[1], [0], [0], [1], [0, 0, 1, 1], [], []>, precision = #tpu.contract_precision<fp32>} : vector<16x96xf32>, vector<96x64xf32>, vector<16x64xf32> -> vector<16x64xf32>
    %5 = vector.extract_strided_slice %4 {offsets = [0, 0], sizes = [16, 32], strides = [1, 1]} : vector<16x64xf32> to vector<16x32xf32>
    %c0_5 = arith.constant 0 : index
    %6 = memref.load %arg4[%c0_5] : memref<1xf32, #tpu.memory_space<smem>>
    %7 = vector.broadcast %6 : f32 to vector<16x32xf32>
    %8 = arith.addf %5, %7 : vector<16x32xf32>
    %9 = vector.extract_strided_slice %4 {offsets = [0, 32], sizes = [16, 32], strides = [1, 1]} : vector<16x64xf32> to vector<16x32xf32>
    %10 = tpu.reciprocal %8 : vector<16x32xf32> -> vector<16x32xf32>
    %11 = arith.mulf %9, %10 : vector<16x32xf32>
    %12 = arith.mulf %11, %0 : vector<16x32xf32>
    %c0_6 = arith.constant 0 : index
    %c0_7 = arith.constant 0 : index
    %13 = vector.load %arg5[%c0_6, %c0_7] : memref<16x32xf32, #tpu.memory_space<vmem>>, vector<16x32xf32>
    tpu.vector_store %arg5[%c0_6, %c0_7], %12 {strides = array<i32>} : memref<16x32xf32, #tpu.memory_space<vmem>>, vector<16x32xf32>,
    return
  }
  func.func @transform_0(%arg0: i32) -> (i32, i32) {
    %c0_i32 = arith.constant 0 : i32
    %c0_i32_0 = arith.constant 0 : i32
    return %arg0, %c0_i32 : i32, i32
  }
  func.func @transform_1(%arg0: i32) -> (i32, i32) {
    %c0_i32 = arith.constant 0 : i32
    %c0_i32_0 = arith.constant 0 : i32
    return %arg0, %c0_i32 : i32, i32
  }
  func.func @transform_2(%arg0: i32) -> (i32, i32) {
    %c0_i32 = arith.constant 0 : i32
    %c0_i32_0 = arith.constant 0 : i32
    %c0_i32_1 = arith.constant 0 : i32
    return %c0_i32, %c0_i32_0 : i32, i32
  }
  func.func @transform_3(%arg0: i32) -> i32 {
    %c0_i32 = arith.constant 0 : i32
    %c0_i32_0 = arith.constant 0 : i32
    return %c0_i32 : i32
  }
  func.func @transform_4(%arg0: i32) -> (i32, i32) {
    %c0_i32 = arith.constant 0 : i32
    %c0_i32_0 = arith.constant 0 : i32
    return %arg0, %c0_i32 : i32, i32
  }
}

</mosaic_0001>

<llo_original>
// kernel: tpu_custom_call.1
$region0: #{tpu_custom_call.1}
  #allocation0 [shape = 'u32[]', space=smem, size = 0x4, offset = 0x4, fixed_abs, tag = 'smem constant byte address 0x4 - core index']
  #allocation1 [shape = 'u32[144,128]{1,0:T(1,128)}', space=vmem, size = 0x12000, scoped, tag = 'internal scratch']
  #allocation2 [shape = 'f32[1]{0:T(128)S(6)}', space=smem, size = 0x200, scoped, tag = 'scoped memory for tpu_custom_call.1']
  %s0 = inlined_call_operand.vmem [shape: f32[16,32], index: 0, kind: input, shape index: {}]
  %s1 = inlined_call_operand.vmem [shape: f32[16,64], index: 1, kind: input, shape index: {}]
  %s2 = inlined_call_operand.vmem [shape: f32[96,64], index: 2, kind: input, shape index: {}]
  %s3 = inlined_call_operand.<no memory space> [shape: f32[1], index: 3, kind: input, shape index: {}]
  %s4 = inlined_call_operand.hbm [shape: f32[16,32], index: 4, kind: output, shape index: {}]
  %s5 = sld [smem:[#allocation0]]
  $region26: #{tpu_custom_call.1} parent=0
    _
  %s7 = ssub.s32 1, %s5
  %s8 = scalar_select 0, %s7, %s5
  %9 = sst [smem:[#allocation2]] %s3
  $region1: #{tpu_custom_call.1} parent=0
    #allocation3 [shape = 'u8[8192]{0}', space=vmem, size = 0x2000, scoped, tag = 'output window, operand 0, single buffered']
    #allocation4 [shape = 's32[1]{0}', space=sflag, size = 0x4, scoped, tag = 'scoped memory for tpu_custom_call.1']
    %10 = vsyncpa [#allocation4], 0
    // Predicated region
    $region2: #{tpu_custom_call.1} parent=1 // pred_check
      _
    $region3: #{tpu_custom_call.1} parent=1 // pred_check_branch
      %12 = sbr.rel (0) target = $region5
    $region4: #{tpu_custom_call.1} parent=1 // pred_region
      _
    $region5: #{tpu_custom_call.1} parent=1 // pred_fallthru
      _
    // Predicated region
    $region6: #{tpu_custom_call.1} parent=1 // pred_check
      _
    $region7: #{tpu_custom_call.1} parent=1 // pred_check_branch
      %14 = sbr.rel (0) target = $region9
    $region8: #{tpu_custom_call.1} parent=1 // pred_region
      _
    $region9: #{tpu_custom_call.1} parent=1 // pred_fallthru
      _
    // Predicated region
    $region10: #{tpu_custom_call.1} parent=1 // pred_check
      _
    $region11: #{tpu_custom_call.1} parent=1 // pred_check_branch
      %16 = sbr.rel (0) target = $region13
    $region12: #{tpu_custom_call.1} parent=1 // pred_region
      _
    $region13: #{tpu_custom_call.1} parent=1 // pred_fallthru
      _
    // Predicated region
    $region14: #{tpu_custom_call.1} parent=1 // pred_check
      _
    $region15: #{tpu_custom_call.1} parent=1 // pred_check_branch
      %18 = sbr.rel (0) target = $region17
    $region16: #{tpu_custom_call.1} parent=1 // pred_region
      _
    $region17: #{tpu_custom_call.1} parent=1 // pred_fallthru
      _
    %v19 = vld [vmem:[%s0] sm:$0xff]
    %v20 = vld [vmem:[%s0 + $0x8] sm:$0xff]
    %v21 = vld [vmem:[%s1] sm:$0xff]
    %v22 = vld [vmem:[%s1 + $0x8] sm:$0xff]
    %25 = vrot.lane.b32.xlu0 %v21, 32
    %v26 = vpop.permute.xlu0 %25
    %27 = vrot.lane.b32.xlu0 %v22, 32
    %v28 = vpop.permute.xlu0 %27
    %vm31 = vcmask 261120
    %v32 = vsel %vm31, %v19, %v26
    %v33 = vsel %vm31, %v20, %v28
    %v34 = vld [vmem:[%s2] sm:$0xff]
    %v35 = vld [vmem:[%s2 + $0x8] sm:$0xff]
    %v36 = vld [vmem:[%s2 + $0x10] sm:$0xff]
    %v37 = vld [vmem:[%s2 + $0x18] sm:$0xff]
    %v38 = vld [vmem:[%s2 + $0x20] sm:$0xff]
    %v39 = vld [vmem:[%s2 + $0x28] sm:$0xff]
    %v40 = vld [vmem:[%s2 + $0x30] sm:$0xff]
    %v41 = vld [vmem:[%s2 + $0x38] sm:$0xff]
    %v42 = vld [vmem:[%s2 + $0x40] sm:$0xff]
    %v43 = vld [vmem:[%s2 + $0x48] sm:$0xff]
    %v44 = vld [vmem:[%s2 + $0x50] sm:$0xff]
    %v45 = vld [vmem:[%s2 + $0x58] sm:$0xff]
    %vm46 = vcmask 785408
    %v48 = vsel %vm46, %v32, 0
    %v51 = vsel %vm46, %v33, 0
    %53 = vmatprep.subr.mxu0 0.0
    %v54 = vand.u32 %v34, 4294901760
    %55 = vmatpush1.msra.mxu0 %v54
    %56 = vmatprep.subr.mxu0 0.0
    %v57 = vand.u32 %v35, 4294901760
    %58 = vmatpush1.msra.mxu0 %v57
    %59 = vmatprep.subr.mxu0 0.0
    %v60 = vand.u32 %v36, 4294901760
    %61 = vmatpush1.msra.mxu0 %v60
    %62 = vmatprep.subr.mxu0 0.0
    %v63 = vand.u32 %v37, 4294901760
    %64 = vmatpush1.msra.mxu0 %v63
    %65 = vmatprep.subr.mxu0 0.0
    %v66 = vand.u32 %v38, 4294901760
    %67 = vmatpush1.msra.mxu0 %v66
    %68 = vmatprep.subr.mxu0 0.0
    %v69 = vand.u32 %v39, 4294901760
    %70 = vmatpush1.msra.mxu0 %v69
    %71 = vmatprep.subr.mxu0 0.0
    %v72 = vand.u32 %v40, 4294901760
    %73 = vmatpush1.msra.mxu0 %v72
    %74 = vmatprep.subr.mxu0 0.0
    %v75 = vand.u32 %v41, 4294901760
    %76 = vmatpush1.msra.mxu0 %v75
    %77 = vmatprep.subr.mxu0 0.0
    %v78 = vand.u32 %v42, 4294901760
    %79 = vmatpush1.msra.mxu0 %v78
    %80 = vmatprep.subr.mxu0 0.0
    %v81 = vand.u32 %v43, 4294901760
    %82 = vmatpush1.msra.mxu0 %v81
    %83 = vmatprep.subr.mxu0 0.0
    %v84 = vand.u32 %v44, 4294901760
    %85 = vmatpush1.msra.mxu0 %v84
    %86 = vmatprep.subr.mxu0 0.0
    %v87 = vand.u32 %v45, 4294901760
    %88 = vmatpush1.msra.mxu0 %v87
    %89 = vmatprep.subr.mxu0 0.0
    %90 = vmatpush1.msra.mxu0 0.0
    %91 = vmatprep.subr.mxu0 0.0
    %92 = vmatpush1.msra.mxu0 0.0
    %93 = vmatprep.subr.mxu0 0.0
    %94 = vmatpush1.msra.mxu0 0.0
    %95 = vmatprep.subr.mxu0 0.0
    %96 = vmatpush1.msra.mxu0 0.0
    %97 = vmatprep.subr.mxu0 0.0
    %98 = vmatpush1.msra.mxu0 0.0
    %99 = vmatprep.subr.mxu0 0.0
    %100 = vmatpush1.msra.mxu0 0.0
    %101 = vmatprep.subr.mxu0 0.0
    %102 = vmatpush1.msra.mxu0 0.0
    %103 = vmatprep.subr.mxu0 0.0
    %104 = vmatpush1.msra.mxu0 0.0
    %105 = vmatprep.subr.mxu0 0.0
    %106 = vmatpush1.msra.mxu0 0.0
    %107 = vmatprep.subr.mxu0 0.0
    %108 = vmatpush1.msra.mxu0 0.0
    %109 = vmatprep.subr.mxu0 0.0
    %110 = vmatpush1.msra.mxu0 0.0
    %111 = vmatprep.subr.mxu0 0.0
    %112 = vmatpush1.msra.mxu0 0.0
    %113 = vmatprep.subr.mxu0 0.0
    %114 = vmatpush1.msra.mxu0 0.0
    %115 = vmatprep.subr.mxu0 0.0
    %116 = vmatpush1.msra.mxu0 0.0
    %117 = vmatprep.subr.mxu0 0.0
    %118 = vmatpush1.msra.mxu0 0.0
    %119 = vmatprep.subr.mxu0 0.0
    %120 = vmatpush1.msra.mxu0 0.0
    %121 = vmatprep.subr.mxu0 0.0
    %122 = vmatpush1.msra.mxu0 0.0
    %123 = vmatprep.subr.mxu0 0.0
    %124 = vmatpush1.msra.mxu0 0.0
    %125 = vmatprep.subr.mxu0 0.0
    %126 = vmatpush1.msra.mxu0 0.0
    %127 = vmatprep.subr.mxu0 0.0
    %128 = vmatpush1.msra.mxu0 0.0
    %129 = vmatprep.mubr.f32.mxu0 0.0
    %v130 = vand.u32 %v48, 4294901760
    %v131 = vsub.f32 %v48, %v130
    %v132 = vand.u32 %v131, 4294901760
    %v133 = vsub.f32 %v131, %v132
    %v134 = vand.u32 %v133, 4294901760
    %135 = vmatmul.mubr.f32.gmra.mrb[0].mxu0 %v134
    %v136 = vpop.f32.mrb[0].mxu0
    %v137 = vadd.f32 0.0, %v136
    %v138 = vpop.f32.mrb[0].mxu0
    %139 = vmatprep.mubr.f32.mxu0 0.0
    %v140 = vand.u32 %v51, 4294901760
    %v141 = vsub.f32 %v51, %v140
    %v142 = vand.u32 %v141, 4294901760
    %v143 = vsub.f32 %v141, %v142
    %v144 = vand.u32 %v143, 4294901760
    %145 = vmatmul.mubr.f32.gmra.mrb[0].mxu0 %v144
    %v146 = vpop.f32.mrb[0].mxu0
    %v147 = vadd.f32 0.0, %v146
    %v148 = vpop.f32.mrb[0].mxu0
    %149 = vdwg.mxu0
    %150 = vmatprep.subr.mxu0 0.0
    %v151 = vand.u32 %v34, 4294901760
    %v152 = vsub.f32 %v34, %v151
    %v153 = vand.u32 %v152, 4294901760
    %v154 = vsub.f32 %v152, %v153
    %v155 = vand.u32 %v154, 4294901760
    %156 = vmatpush1.msra.mxu0 %v155
    %157 = vmatprep.subr.mxu0 0.0
    %v158 = vand.u32 %v35, 4294901760
    %v159 = vsub.f32 %v35, %v158
    %v160 = vand.u32 %v159, 4294901760
    %v161 = vsub.f32 %v159, %v160
    %v162 = vand.u32 %v161, 4294901760
    %163 = vmatpush1.msra.mxu0 %v162
    %164 = vmatprep.subr.mxu0 0.0
    %v165 = vand.u32 %v36, 4294901760
    %v166 = vsub.f32 %v36, %v165
    %v167 = vand.u32 %v166, 4294901760
    %v168 = vsub.f32 %v166, %v167
    %v169 = vand.u32 %v168, 4294901760
    %170 = vmatpush1.msra.mxu0 %v169
    %171 = vmatprep.subr.mxu0 0.0
    %v172 = vand.u32 %v37, 4294901760
    %v173 = vsub.f32 %v37, %v172
    %v174 = vand.u32 %v173, 4294901760
    %v175 = vsub.f32 %v173, %v174
    %v176 = vand.u32 %v175, 4294901760
    %177 = vmatpush1.msra.mxu0 %v176
    %178 = vmatprep.subr.mxu0 0.0
    %v179 = vand.u32 %v38, 4294901760
    %v180 = vsub.f32 %v38, %v179
    %v181 = vand.u32 %v180, 4294901760
    %v182 = vsub.f32 %v180, %v181
    %v183 = vand.u32 %v182, 4294901760
    %184 = vmatpush1.msra.mxu0 %v183
    %185 = vmatprep.subr.mxu0 0.0
    %v186 = vand.u32 %v39, 4294901760
    %v187 = vsub.f32 %v39, %v186
    %v188 = vand.u32 %v187, 4294901760
    %v189 = vsub.f32 %v187, %v188
    %v190 = vand.u32 %v189, 4294901760
    %191 = vmatpush1.msra.mxu0 %v190
    %192 = vmatprep.subr.mxu0 0.0
    %v193 = vand.u32 %v40, 4294901760
    %v194 = vsub.f32 %v40, %v193
    %v195 = vand.u32 %v194, 4294901760
    %v196 = vsub.f32 %v194, %v195
    %v197 = vand.u32 %v196, 4294901760
    %198 = vmatpush1.msra.mxu0 %v197
    %199 = vmatprep.subr.mxu0 0.0
    %v200 = vand.u32 %v41, 4294901760
    %v201 = vsub.f32 %v41, %v200
    %v202 = vand.u32 %v201, 4294901760
    %v203 = vsub.f32 %v201, %v202
    %v204 = vand.u32 %v203, 4294901760
    %205 = vmatpush1.msra.mxu0 %v204
    %206 = vmatprep.subr.mxu0 0.0
    %v207 = vand.u32 %v42, 4294901760
    %v208 = vsub.f32 %v42, %v207
    %v209 = vand.u32 %v208, 4294901760
    %v210 = vsub.f32 %v208, %v209
    %v211 = vand.u32 %v210, 4294901760
    %212 = vmatpush1.msra.mxu0 %v211
    %213 = vmatprep.subr.mxu0 0.0
    %v214 = vand.u32 %v43, 4294901760
    %v215 = vsub.f32 %v43, %v214
    %v216 = vand.u32 %v215, 4294901760
    %v217 = vsub.f32 %v215, %v216
    %v218 = vand.u32 %v217, 4294901760
    %219 = vmatpush1.msra.mxu0 %v218
    %220 = vmatprep.subr.mxu0 0.0
    %v221 = vand.u32 %v44, 4294901760
    %v222 = vsub.f32 %v44, %v221
    %v223 = vand.u32 %v222, 4294901760
    %v224 = vsub.f32 %v222, %v223
    %v225 = vand.u32 %v224, 4294901760
    %226 = vmatpush1.msra.mxu0 %v225
    %227 = vmatprep.subr.mxu0 0.0
    %v228 = vand.u32 %v45, 4294901760
    %v229 = vsub.f32 %v45, %v228
    %v230 = vand.u32 %v229, 4294901760
    %v231 = vsub.f32 %v229, %v230
    %v232 = vand.u32 %v231, 4294901760
    %233 = vmatpush1.msra.mxu0 %v232
    %234 = vmatprep.subr.mxu0 0.0
    %235 = vmatpush1.msra.mxu0 0.0
    %236 = vmatprep.subr.mxu0 0.0
    %237 = vmatpush1.msra.mxu0 0.0
    %238 = vmatprep.subr.mxu0 0.0
    %239 = vmatpush1.msra.mxu0 0.0
    %240 = vmatprep.subr.mxu0 0.0
    %241 = vmatpush1.msra.mxu0 0.0
    %242 = vmatprep.subr.mxu0 0.0
    %243 = vmatpush1.msra.mxu0 0.0
    %244 = vmatprep.subr.mxu0 0.0
    %245 = vmatpush1.msra.mxu0 0.0
    %246 = vmatprep.subr.mxu0 0.0
    %247 = vmatpush1.msra.mxu0 0.0
    %248 = vmatprep.subr.mxu0 0.0
    %249 = vmatpush1.msra.mxu0 0.0
    %250 = vmatprep.subr.mxu0 0.0
    %251 = vmatpush1.msra.mxu0 0.0
    %252 = vmatprep.subr.mxu0 0.0
    %253 = vmatpush1.msra.mxu0 0.0
    %254 = vmatprep.subr.mxu0 0.0
    %255 = vmatpush1.msra.mxu0 0.0
    %256 = vmatprep.subr.mxu0 0.0
    %257 = vmatpush1.msra.mxu0 0.0
    %258 = vmatprep.subr.mxu0 0.0
    %259 = vmatpush1.msra.mxu0 0.0
    %260 = vmatprep.subr.mxu0 0.0
    %261 = vmatpush1.msra.mxu0 0.0
    %262 = vmatprep.subr.mxu0 0.0
    %263 = vmatpush1.msra.mxu0 0.0
    %264 = vmatprep.subr.mxu0 0.0
    %265 = vmatpush1.msra.mxu0 0.0
    %266 = vmatprep.subr.mxu0 0.0
    %267 = vmatpush1.msra.mxu0 0.0
    %268 = vmatprep.subr.mxu0 0.0
    %269 = vmatpush1.msra.mxu0 0.0
    %270 = vmatprep.subr.mxu0 0.0
    %271 = vmatpush1.msra.mxu0 0.0
    %272 = vmatprep.subr.mxu0 0.0
    %273 = vmatpush1.msra.mxu0 0.0
    %274 = vmatprep.mubr.f32.mxu0 0.0
    %v275 = vand.u32 %v48, 4294901760
    %276 = vmatmul.mubr.f32.gmra.mrb[0].mxu0 %v275
    %v277 = vpop.f32.mrb[0].mxu0
    %v278 = vadd.f32 %v137, %v277
    %v279 = vpop.f32.mrb[0].mxu0
    %280 = vmatprep.mubr.f32.mxu0 0.0
    %v281 = vand.u32 %v51, 4294901760
    %282 = vmatmul.mubr.f32.gmra.mrb[0].mxu0 %v281
    %v283 = vpop.f32.mrb[0].mxu0
    %v284 = vadd.f32 %v147, %v283
    %v285 = vpop.f32.mrb[0].mxu0
    %286 = vdwg.mxu0
    %287 = vmatprep.subr.mxu0 0.0
    %v288 = vand.u32 %v34, 4294901760
    %v289 = vsub.f32 %v34, %v288
    %290 = vmatpush1.msra.mxu0 %v289
    %291 = vmatprep.subr.mxu0 0.0
    %v292 = vand.u32 %v35, 4294901760
    %v293 = vsub.f32 %v35, %v292
    %294 = vmatpush1.msra.mxu0 %v293
    %295 = vmatprep.subr.mxu0 0.0
    %v296 = vand.u32 %v36, 4294901760
    %v297 = vsub.f32 %v36, %v296
    %298 = vmatpush1.msra.mxu0 %v297
    %299 = vmatprep.subr.mxu0 0.0
    %v300 = vand.u32 %v37, 4294901760
    %v301 = vsub.f32 %v37, %v300
    %302 = vmatpush1.msra.mxu0 %v301
    %303 = vmatprep.subr.mxu0 0.0
    %v304 = vand.u32 %v38, 4294901760
    %v305 = vsub.f32 %v38, %v304
    %306 = vmatpush1.msra.mxu0 %v305
    %307 = vmatprep.subr.mxu0 0.0
    %v308 = vand.u32 %v39, 4294901760
    %v309 = vsub.f32 %v39, %v308
    %310 = vmatpush1.msra.mxu0 %v309
    %311 = vmatprep.subr.mxu0 0.0
    %v312 = vand.u32 %v40, 4294901760
    %v313 = vsub.f32 %v40, %v312
    %314 = vmatpush1.msra.mxu0 %v313
    %315 = vmatprep.subr.mxu0 0.0
    %v316 = vand.u32 %v41, 4294901760
    %v317 = vsub.f32 %v41, %v316
    %318 = vmatpush1.msra.mxu0 %v317
    %319 = vmatprep.subr.mxu0 0.0
    %v320 = vand.u32 %v42, 4294901760
    %v321 = vsub.f32 %v42, %v320
    %322 = vmatpush1.msra.mxu0 %v321
    %323 = vmatprep.subr.mxu0 0.0
    %v324 = vand.u32 %v43, 4294901760
    %v325 = vsub.f32 %v43, %v324
    %326 = vmatpush1.msra.mxu0 %v325
    %327 = vmatprep.subr.mxu0 0.0
    %v328 = vand.u32 %v44, 4294901760
    %v329 = vsub.f32 %v44, %v328
    %330 = vmatpush1.msra.mxu0 %v329
    %331 = vmatprep.subr.mxu0 0.0
    %v332 = vand.u32 %v45, 4294901760
    %v333 = vsub.f32 %v45, %v332
    %334 = vmatpush1.msra.mxu0 %v333
    %335 = vmatprep.subr.mxu0 0.0
    %336 = vmatpush1.msra.mxu0 0.0
    %337 = vmatprep.subr.mxu0 0.0
    %338 = vmatpush1.msra.mxu0 0.0
    %339 = vmatprep.subr.mxu0 0.0
    %340 = vmatpush1.msra.mxu0 0.0
    %341 = vmatprep.subr.mxu0 0.0
    %342 = vmatpush1.msra.mxu0 0.0
    %343 = vmatprep.subr.mxu0 0.0
    %344 = vmatpush1.msra.mxu0 0.0
    %345 = vmatprep.subr.mxu0 0.0
    %346 = vmatpush1.msra.mxu0 0.0
    %347 = vmatprep.subr.mxu0 0.0
    %348 = vmatpush1.msra.mxu0 0.0
    %349 = vmatprep.subr.mxu0 0.0
    %350 = vmatpush1.msra.mxu0 0.0
    %351 = vmatprep.subr.mxu0 0.0
    %352 = vmatpush1.msra.mxu0 0.0
    %353 = vmatprep.subr.mxu0 0.0
    %354 = vmatpush1.msra.mxu0 0.0
    %355 = vmatprep.subr.mxu0 0.0
    %356 = vmatpush1.msra.mxu0 0.0
    %357 = vmatprep.subr.mxu0 0.0
    %358 = vmatpush1.msra.mxu0 0.0
    %359 = vmatprep.subr.mxu0 0.0
    %360 = vmatpush1.msra.mxu0 0.0
    %361 = vmatprep.subr.mxu0 0.0
    %362 = vmatpush1.msra.mxu0 0.0
    %363 = vmatprep.subr.mxu0 0.0
    %364 = vmatpush1.msra.mxu0 0.0
    %365 = vmatprep.subr.mxu0 0.0
    %366 = vmatpush1.msra.mxu0 0.0
    %367 = vmatprep.subr.mxu0 0.0
    %368 = vmatpush1.msra.mxu0 0.0
    %369 = vmatprep.subr.mxu0 0.0
    %370 = vmatpush1.msra.mxu0 0.0
    %371 = vmatprep.subr.mxu0 0.0
    %372 = vmatpush1.msra.mxu0 0.0
    %373 = vmatprep.subr.mxu0 0.0
    %374 = vmatpush1.msra.mxu0 0.0
    %375 = vmatprep.mubr.f32.mxu0 0.0
    %v376 = vand.u32 %v48, 4294901760
    %v377 = vsub.f32 %v48, %v376
    %378 = vmatmul.mubr.f32.gmra.mrb[0].mxu0 %v377
    %v379 = vpop.f32.mrb[0].mxu0
    %v380 = vadd.f32 %v278, %v379
    %v381 = vpop.f32.mrb[0].mxu0
    %382 = vmatprep.mubr.f32.mxu0 0.0
    %v383 = vand.u32 %v51, 4294901760
    %v384 = vsub.f32 %v51, %v383
    %385 = vmatmul.mubr.f32.gmra.mrb[0].mxu0 %v384
    %v386 = vpop.f32.mrb[0].mxu0
    %v387 = vadd.f32 %v284, %v386
    %v388 = vpop.f32.mrb[0].mxu0
    %389 = vdwg.mxu0
    %390 = vmatprep.subr.mxu0 0.0
    %v391 = vand.u32 %v34, 4294901760
    %392 = vmatpush1.msra.mxu0 %v391
    %393 = vmatprep.subr.mxu0 0.0
    %v394 = vand.u32 %v35, 4294901760
    %395 = vmatpush1.msra.mxu0 %v394
    %396 = vmatprep.subr.mxu0 0.0
    %v397 = vand.u32 %v36, 4294901760
    %398 = vmatpush1.msra.mxu0 %v397
    %399 = vmatprep.subr.mxu0 0.0
    %v400 = vand.u32 %v37, 4294901760
    %401 = vmatpush1.msra.mxu0 %v400
    %402 = vmatprep.subr.mxu0 0.0
    %v403 = vand.u32 %v38, 4294901760
    %404 = vmatpush1.msra.mxu0 %v403
    %405 = vmatprep.subr.mxu0 0.0
    %v406 = vand.u32 %v39, 4294901760
    %407 = vmatpush1.msra.mxu0 %v406
    %408 = vmatprep.subr.mxu0 0.0
    %v409 = vand.u32 %v40, 4294901760
    %410 = vmatpush1.msra.mxu0 %v409
    %411 = vmatprep.subr.mxu0 0.0
    %v412 = vand.u32 %v41, 4294901760
    %413 = vmatpush1.msra.mxu0 %v412
    %414 = vmatprep.subr.mxu0 0.0
    %v415 = vand.u32 %v42, 4294901760
    %416 = vmatpush1.msra.mxu0 %v415
    %417 = vmatprep.subr.mxu0 0.0
    %v418 = vand.u32 %v43, 4294901760
    %419 = vmatpush1.msra.mxu0 %v418
    %420 = vmatprep.subr.mxu0 0.0
    %v421 = vand.u32 %v44, 4294901760
    %422 = vmatpush1.msra.mxu0 %v421
    %423 = vmatprep.subr.mxu0 0.0
    %v424 = vand.u32 %v45, 4294901760
    %425 = vmatpush1.msra.mxu0 %v424
    %426 = vmatprep.subr.mxu0 0.0
    %427 = vmatpush1.msra.mxu0 0.0
    %428 = vmatprep.subr.mxu0 0.0
    %429 = vmatpush1.msra.mxu0 0.0
    %430 = vmatprep.subr.mxu0 0.0
    %431 = vmatpush1.msra.mxu0 0.0
    %432 = vmatprep.subr.mxu0 0.0
    %433 = vmatpush1.msra.mxu0 0.0
    %434 = vmatprep.subr.mxu0 0.0
    %435 = vmatpush1.msra.mxu0 0.0
    %436 = vmatprep.subr.mxu0 0.0
    %437 = vmatpush1.msra.mxu0 0.0
    %438 = vmatprep.subr.mxu0 0.0
    %439 = vmatpush1.msra.mxu0 0.0
    %440 = vmatprep.subr.mxu0 0.0
    %441 = vmatpush1.msra.mxu0 0.0
    %442 = vmatprep.subr.mxu0 0.0
    %443 = vmatpush1.msra.mxu0 0.0
    %444 = vmatprep.subr.mxu0 0.0
    %445 = vmatpush1.msra.mxu0 0.0
    %446 = vmatprep.subr.mxu0 0.0
    %447 = vmatpush1.msra.mxu0 0.0
    %448 = vmatprep.subr.mxu0 0.0
    %449 = vmatpush1.msra.mxu0 0.0
    %450 = vmatprep.subr.mxu0 0.0
    %451 = vmatpush1.msra.mxu0 0.0
    %452 = vmatprep.subr.mxu0 0.0
    %453 = vmatpush1.msra.mxu0 0.0
    %454 = vmatprep.subr.mxu0 0.0
    %455 = vmatpush1.msra.mxu0 0.0
    %456 = vmatprep.subr.mxu0 0.0
    %457 = vmatpush1.msra.mxu0 0.0
    %458 = vmatprep.subr.mxu0 0.0
    %459 = vmatpush1.msra.mxu0 0.0
    %460 = vmatprep.subr.mxu0 0.0
    %461 = vmatpush1.msra.mxu0 0.0
    %462 = vmatprep.subr.mxu0 0.0
    %463 = vmatpush1.msra.mxu0 0.0
    %464 = vmatprep.subr.mxu0 0.0
    %465 = vmatpush1.msra.mxu0 0.0
    %466 = vmatprep.mubr.f32.mxu0 0.0
    %v467 = vand.u32 %v48, 4294901760
    %v468 = vsub.f32 %v48, %v467
    %v469 = vand.u32 %v468, 4294901760
    %470 = vmatmul.mubr.f32.gmra.mrb[0].mxu0 %v469
    %v471 = vpop.f32.mrb[0].mxu0
    %v472 = vadd.f32 %v380, %v471
    %v473 = vpop.f32.mrb[0].mxu0
    %474 = vmatprep.mubr.f32.mxu0 0.0
    %v475 = vand.u32 %v51, 4294901760
    %v476 = vsub.f32 %v51, %v475
    %v477 = vand.u32 %v476, 4294901760
    %478 = vmatmul.mubr.f32.gmra.mrb[0].mxu0 %v477
    %v479 = vpop.f32.mrb[0].mxu0
    %v480 = vadd.f32 %v387, %v479
    %v481 = vpop.f32.mrb[0].mxu0
    %482 = vdwg.mxu0
    %483 = vmatprep.subr.mxu0 0.0
    %v484 = vand.u32 %v34, 4294901760
    %v485 = vsub.f32 %v34, %v484
    %v486 = vand.u32 %v485, 4294901760
    %487 = vmatpush1.msra.mxu0 %v486
    %488 = vmatprep.subr.mxu0 0.0
    %v489 = vand.u32 %v35, 4294901760
    %v490 = vsub.f32 %v35, %v489
    %v491 = vand.u32 %v490, 4294901760
    %492 = vmatpush1.msra.mxu0 %v491
    %493 = vmatprep.subr.mxu0 0.0
    %v494 = vand.u32 %v36, 4294901760
    %v495 = vsub.f32 %v36, %v494
    %v496 = vand.u32 %v495, 4294901760
    %497 = vmatpush1.msra.mxu0 %v496
    %498 = vmatprep.subr.mxu0 0.0
    %v499 = vand.u32 %v37, 4294901760
    %v500 = vsub.f32 %v37, %v499
    %v501 = vand.u32 %v500, 4294901760
    %502 = vmatpush1.msra.mxu0 %v501
    %503 = vmatprep.subr.mxu0 0.0
    %v504 = vand.u32 %v38, 4294901760
    %v505 = vsub.f32 %v38, %v504
    %v506 = vand.u32 %v505, 4294901760
    %507 = vmatpush1.msra.mxu0 %v506
    %508 = vmatprep.subr.mxu0 0.0
    %v509 = vand.u32 %v39, 4294901760
    %v510 = vsub.f32 %v39, %v509
    %v511 = vand.u32 %v510, 4294901760
    %512 = vmatpush1.msra.mxu0 %v511
    %513 = vmatprep.subr.mxu0 0.0
    %v514 = vand.u32 %v40, 4294901760
    %v515 = vsub.f32 %v40, %v514
    %v516 = vand.u32 %v515, 4294901760
    %517 = vmatpush1.msra.mxu0 %v516
    %518 = vmatprep.subr.mxu0 0.0
    %v519 = vand.u32 %v41, 4294901760
    %v520 = vsub.f32 %v41, %v519
    %v521 = vand.u32 %v520, 4294901760
    %522 = vmatpush1.msra.mxu0 %v521
    %523 = vmatprep.subr.mxu0 0.0
    %v524 = vand.u32 %v42, 4294901760
    %v525 = vsub.f32 %v42, %v524
    %v526 = vand.u32 %v525, 4294901760
    %527 = vmatpush1.msra.mxu0 %v526
    %528 = vmatprep.subr.mxu0 0.0
    %v529 = vand.u32 %v43, 4294901760
    %v530 = vsub.f32 %v43, %v529
    %v531 = vand.u32 %v530, 4294901760
    %532 = vmatpush1.msra.mxu0 %v531
    %533 = vmatprep.subr.mxu0 0.0
    %v534 = vand.u32 %v44, 4294901760
    %v535 = vsub.f32 %v44, %v534
    %v536 = vand.u32 %v535, 4294901760
    %537 = vmatpush1.msra.mxu0 %v536
    %538 = vmatprep.subr.mxu0 0.0
    %v539 = vand.u32 %v45, 4294901760
    %v540 = vsub.f32 %v45, %v539
    %v541 = vand.u32 %v540, 4294901760
    %542 = vmatpush1.msra.mxu0 %v541
    %543 = vmatprep.subr.mxu0 0.0
    %544 = vmatpush1.msra.mxu0 0.0
    %545 = vmatprep.subr.mxu0 0.0
    %546 = vmatpush1.msra.mxu0 0.0
    %547 = vmatprep.subr.mxu0 0.0
    %548 = vmatpush1.msra.mxu0 0.0
    %549 = vmatprep.subr.mxu0 0.0
    %550 = vmatpush1.msra.mxu0 0.0
    %551 = vmatprep.subr.mxu0 0.0
    %552 = vmatpush1.msra.mxu0 0.0
    %553 = vmatprep.subr.mxu0 0.0
    %554 = vmatpush1.msra.mxu0 0.0
    %555 = vmatprep.subr.mxu0 0.0
    %556 = vmatpush1.msra.mxu0 0.0
    %557 = vmatprep.subr.mxu0 0.0
    %558 = vmatpush1.msra.mxu0 0.0
    %559 = vmatprep.subr.mxu0 0.0
    %560 = vmatpush1.msra.mxu0 0.0
    %561 = vmatprep.subr.mxu0 0.0
    %562 = vmatpush1.msra.mxu0 0.0
    %563 = vmatprep.subr.mxu0 0.0
    %564 = vmatpush1.msra.mxu0 0.0
    %565 = vmatprep.subr.mxu0 0.0
    %566 = vmatpush1.msra.mxu0 0.0
    %567 = vmatprep.subr.mxu0 0.0
    %568 = vmatpush1.msra.mxu0 0.0
    %569 = vmatprep.subr.mxu0 0.0
    %570 = vmatpush1.msra.mxu0 0.0
    %571 = vmatprep.subr.mxu0 0.0
    %572 = vmatpush1.msra.mxu0 0.0
    %573 = vmatprep.subr.mxu0 0.0
    %574 = vmatpush1.msra.mxu0 0.0
    %575 = vmatprep.subr.mxu0 0.0
    %576 = vmatpush1.msra.mxu0 0.0
    %577 = vmatprep.subr.mxu0 0.0
    %578 = vmatpush1.msra.mxu0 0.0
    %579 = vmatprep.subr.mxu0 0.0
    %580 = vmatpush1.msra.mxu0 0.0
    %581 = vmatprep.subr.mxu0 0.0
    %582 = vmatpush1.msra.mxu0 0.0
    %583 = vmatprep.mubr.f32.mxu0 0.0
    %v584 = vand.u32 %v48, 4294901760
    %585 = vmatmul.mubr.f32.gmra.mrb[0].mxu0 %v584
    %v586 = vpop.f32.mrb[0].mxu0
    %v587 = vadd.f32 %v472, %v586
    %v588 = vpop.f32.mrb[0].mxu0
    %589 = vmatprep.mubr.f32.mxu0 0.0
    %v590 = vand.u32 %v51, 4294901760
    %591 = vmatmul.mubr.f32.gmra.mrb[0].mxu0 %v590
    %v592 = vpop.f32.mrb[0].mxu0
    %v593 = vadd.f32 %v480, %v592
    %v594 = vpop.f32.mrb[0].mxu0
    %595 = vdwg.mxu0
    %596 = vmatprep.subr.mxu0 0.0
    %v597 = vand.u32 %v34, 4294901760
    %598 = vmatpush1.msra.mxu0 %v597
    %599 = vmatprep.subr.mxu0 0.0
    %v600 = vand.u32 %v35, 4294901760
    %601 = vmatpush1.msra.mxu0 %v600
    %602 = vmatprep.subr.mxu0 0.0
    %v603 = vand.u32 %v36, 4294901760
    %604 = vmatpush1.msra.mxu0 %v603
    %605 = vmatprep.subr.mxu0 0.0
    %v606 = vand.u32 %v37, 4294901760
    %607 = vmatpush1.msra.mxu0 %v606
    %608 = vmatprep.subr.mxu0 0.0
    %v609 = vand.u32 %v38, 4294901760
    %610 = vmatpush1.msra.mxu0 %v609
    %611 = vmatprep.subr.mxu0 0.0
    %v612 = vand.u32 %v39, 4294901760
    %613 = vmatpush1.msra.mxu0 %v612
    %614 = vmatprep.subr.mxu0 0.0
    %v615 = vand.u32 %v40, 4294901760
    %616 = vmatpush1.msra.mxu0 %v615
    %617 = vmatprep.subr.mxu0 0.0
    %v618 = vand.u32 %v41, 4294901760
    %619 = vmatpush1.msra.mxu0 %v618
    %620 = vmatprep.subr.mxu0 0.0
    %v621 = vand.u32 %v42, 4294901760
    %622 = vmatpush1.msra.mxu0 %v621
    %623 = vmatprep.subr.mxu0 0.0
    %v624 = vand.u32 %v43, 4294901760
    %625 = vmatpush1.msra.mxu0 %v624
    %626 = vmatprep.subr.mxu0 0.0
    %v627 = vand.u32 %v44, 4294901760
    %628 = vmatpush1.msra.mxu0 %v627
    %629 = vmatprep.subr.mxu0 0.0
    %v630 = vand.u32 %v45, 4294901760
    %631 = vmatpush1.msra.mxu0 %v630
    %632 = vmatprep.subr.mxu0 0.0
    %633 = vmatpush1.msra.mxu0 0.0
    %634 = vmatprep.subr.mxu0 0.0
    %635 = vmatpush1.msra.mxu0 0.0
    %636 = vmatprep.subr.mxu0 0.0
    %637 = vmatpush1.msra.mxu0 0.0
    %638 = vmatprep.subr.mxu0 0.0
    %639 = vmatpush1.msra.mxu0 0.0
    %640 = vmatprep.subr.mxu0 0.0
    %641 = vmatpush1.msra.mxu0 0.0
    %642 = vmatprep.subr.mxu0 0.0
    %643 = vmatpush1.msra.mxu0 0.0
    %644 = vmatprep.subr.mxu0 0.0
    %645 = vmatpush1.msra.mxu0 0.0
    %646 = vmatprep.subr.mxu0 0.0
    %647 = vmatpush1.msra.mxu0 0.0
    %648 = vmatprep.subr.mxu0 0.0
    %649 = vmatpush1.msra.mxu0 0.0
    %650 = vmatprep.subr.mxu0 0.0
    %651 = vmatpush1.msra.mxu0 0.0
    %652 = vmatprep.subr.mxu0 0.0
    %653 = vmatpush1.msra.mxu0 0.0
    %654 = vmatprep.subr.mxu0 0.0
    %655 = vmatpush1.msra.mxu0 0.0
    %656 = vmatprep.subr.mxu0 0.0
    %657 = vmatpush1.msra.mxu0 0.0
    %658 = vmatprep.subr.mxu0 0.0
    %659 = vmatpush1.msra.mxu0 0.0
    %660 = vmatprep.subr.mxu0 0.0
    %661 = vmatpush1.msra.mxu0 0.0
    %662 = vmatprep.subr.mxu0 0.0
    %663 = vmatpush1.msra.mxu0 0.0
    %664 = vmatprep.subr.mxu0 0.0
    %665 = vmatpush1.msra.mxu0 0.0
    %666 = vmatprep.subr.mxu0 0.0
    %667 = vmatpush1.msra.mxu0 0.0
    %668 = vmatprep.subr.mxu0 0.0
    %669 = vmatpush1.msra.mxu0 0.0
    %670 = vmatprep.subr.mxu0 0.0
    %671 = vmatpush1.msra.mxu0 0.0
    %672 = vmatprep.mubr.f32.mxu0 0.0
    %v673 = vand.u32 %v48, 4294901760
    %674 = vmatmul.mubr.f32.gmra.mrb[0].mxu0 %v673
    %v675 = vpop.f32.mrb[0].mxu0
    %v676 = vadd.f32 %v587, %v675
    %v677 = vpop.f32.mrb[0].mxu0
    %678 = vmatprep.mubr.f32.mxu0 0.0
    %v679 = vand.u32 %v51, 4294901760
    %680 = vmatmul.mubr.f32.gmra.mrb[0].mxu0 %v679
    %v681 = vpop.f32.mrb[0].mxu0
    %v682 = vadd.f32 %v593, %v681
    %v683 = vpop.f32.mrb[0].mxu0
    %684 = vdwg.mxu0
    %s685 = sld [smem:[#allocation2]]
    %v686 = vstv %s685
    %v687 = vadd.f32 %v676, %v686
    %v688 = vadd.f32 %v682, %v686
    %v689 = vrcp.pop %v687
    %v690 = vrcp.pop %v688
    %693 = vrot.lane.b32.xlu0 %v689, 32
    %v694 = vpop.permute.xlu0 %693
    %695 = vrot.lane.b32.xlu0 %v690, 32
    %v696 = vpop.permute.xlu0 %695
    %v699 = vmul.f32 %v676, %v694
    %v700 = vmul.f32 %v682, %v696
    %703 = vrot.lane.b32.xlu0 %v19, 32
    %v704 = vpop.permute.xlu0 %703
    %705 = vrot.lane.b32.xlu0 %v20, 32
    %v706 = vpop.permute.xlu0 %705
    %v709 = vmul.f32 %v699, %v704
    %v710 = vmul.f32 %v700, %v706
    %713 = vrot.lane.b32.xlu0 %v709, 96
    %v714 = vpop.permute.xlu0 %713
    %715 = vrot.lane.b32.xlu0 %v710, 96
    %v716 = vpop.permute.xlu0 %715
    %719 = vst.msk [vmem:[#allocation3] sm:$0xff] %vm31, %v714
    %720 = vst.msk [vmem:[#allocation3 + $0x8] sm:$0xff] %vm31, %v716
    // Predicated region
    $region18: #{tpu_custom_call.1} parent=1 // pred_check
      _
    $region19: #{tpu_custom_call.1} parent=1 // pred_check_branch
      %722 = sbr.rel (0) target = $region21
    $region20: #{tpu_custom_call.1} parent=1 // pred_region
      %s724 = ssub.s32 256, 256
      %725 = vsyncadd [#allocation4], %s724
      %s726 = sshll.u32 [#allocation3], 4
      %s727 = int_to_ptr.vmem [resolvable:$true] %s726
      %732 = dma.vmem_to_hbm [thread:$0]  %s727, 256, %s4, [#allocation4], 128, 128, 8
    $region21: #{tpu_custom_call.1} parent=1 // pred_fallthru
      _
    // Predicated region
    $region22: #{tpu_custom_call.1} parent=1 // pred_check
      _
    $region23: #{tpu_custom_call.1} parent=1 // pred_check_branch
      %734 = sbr.rel (0) target = $region25
    $region24: #{tpu_custom_call.1} parent=1 // pred_region
      %735 = dma.done [#allocation4], 256
    $region25: #{tpu_custom_call.1} parent=1 // pred_fallthru
      _
    %736 = vsyncpa [#allocation4], 1

</llo_original>
